<compile_context>
chip_gen: v7x
topology: tpu7x:2x2x1
jax: 0.10.0
libtpu: 0.0.40
codegen_flags: <defaults>
</compile_context>

<pallas_src>
import functools

import jax
import jax.numpy as jnp
from jax.experimental import pallas as pl
from jax.experimental.pallas import tpu as pltpu


# ---------------------------------------------------------------------------
# Kernel bodies (one batch tile each).
# ---------------------------------------------------------------------------
def _resnet_block_kernel_shortcut(x_ref, w0_ref, b0_ref, w1_ref, b1_ref,
                                  ws_ref, out_ref):
    """FC ResNet block tile, linear (bias-free) shortcut."""
    x = x_ref[...]                                   # native dtype -> MXU

    # Shortcut first: dx is accumulated into it, so only a single
    # (block_b, size_out) f32 accumulator stays live.
    acc = jnp.dot(x, ws_ref[...], preferred_element_type=jnp.float32)

    # net = fc_0(relu(x))
    h = jnp.maximum(x, 0)
    net = jnp.dot(h, w0_ref[...], preferred_element_type=jnp.float32)
    net = net + b0_ref[...].astype(jnp.float32)

    # dx = fc_1(relu(net)); cast activations back to the weight dtype so the
    # MXU stays on its fast (bf16) path when parameters are bf16.
    h2 = jnp.maximum(net, 0.0).astype(w1_ref.dtype)
    acc = acc + jnp.dot(h2, w1_ref[...], preferred_element_type=jnp.float32)

    # Fold the b1 add into the final store expression (one f32 tile pass).
    out_ref[...] = (acc + b1_ref[...].astype(jnp.float32)).astype(out_ref.dtype)


def _resnet_block_kernel_identity(x_ref, w0_ref, b0_ref, w1_ref, b1_ref,
                                  out_ref):
    """FC ResNet block tile, identity shortcut."""
    x = x_ref[...]

    h = jnp.maximum(x, 0)
    net = jnp.dot(h, w0_ref[...], preferred_element_type=jnp.float32)
    net = net + b0_ref[...].astype(jnp.float32)

    h2 = jnp.maximum(net, 0.0).astype(w1_ref.dtype)
    dx = jnp.dot(h2, w1_ref[...], preferred_element_type=jnp.float32)

    out_ref[...] = (x.astype(jnp.float32) + dx
                    + b1_ref[...].astype(jnp.float32)).astype(out_ref.dtype)


# ---------------------------------------------------------------------------
# Sizing helpers.
# ---------------------------------------------------------------------------
def _round_up(n, m):
    return ((n + m - 1) // m) * m


def _vmem_cap_bytes():
    """~75% of this generation's per-core VMEM (leave headroom for compiler)."""
    try:
        cap = int(pltpu.get_tpu_info().vmem_capacity_bytes)
    except Exception:                                 # probe only; not masking kernel errors
        cap = 64 * 1024 * 1024                        # conservative (v7x per-TC)
    return (cap * 3) // 4


def _choose_block_b(B, itemsize, size_in, size_out, *, min_steps=4,
                    io_budget=24 << 20):
    """Largest aligned batch tile that still yields >= min_steps grid steps
    (>=2 per TensorCore on v7x) and keeps double-buffered x/out tiles within
    the I/O VMEM budget."""
    sublane = max(8, 32 // max(int(itemsize), 1))     # 8 for f32, 16 for bf16

    def fits(c):  # 2 buffers each for x and out tiles
        return 4 * c * (size_in + size_out) * itemsize <= io_budget

    cands = (2048, 1024, 512, 256, 128, 64, 32, 16, 8)
    for cand in cands:
        if (cand <= B and B % cand == 0 and cand % sublane == 0
                and B // cand >= min_steps and fits(cand)):
            return cand
    for cand in cands:                                # fallback: any aligned divisor
        if cand <= B and B % cand == 0 and cand % sublane == 0 and fits(cand):
            return cand
    return B                                          # single full-array block


def _vmem_limit_bytes(block_b, size_in, size_h, size_out, itemsize,
                      has_shortcut, single_buffer_weights):
    f32 = 4
    # Pipelined x/out tiles (double-buffered) -> only these get headroom.
    io = 2 * block_b * (size_in + size_out) * itemsize
    # Resident weights + biases: x1 when single-buffered, x2 in the fallback.
    w = (size_in * size_h + size_h * size_out + size_h + size_out) * itemsize
    if has_shortcut:
        w += size_in * size_out * itemsize
    w_bufs = 1 if single_buffer_weights else 2
    # f32 intermediates inside the kernel body.
    scratch = block_b * (size_h + size_out) * f32
    need = 2 * io + w_bufs * w + scratch + (4 << 20)  # 4 MiB compiler-internal allowance
    return int(min(_vmem_cap_bytes(), max(need, 16 << 20)))


def _const_spec(shape, weight_mode):
    """BlockSpec for an operand whose block never changes across the grid."""
    index_map = lambda i: (0, 0)
    if weight_mode is None:
        return pl.BlockSpec(shape, index_map)
    return pl.BlockSpec(shape, index_map, pipeline_mode=weight_mode)


# ---------------------------------------------------------------------------
# pallas_call wrapper.
# ---------------------------------------------------------------------------
def _pallas_forward(args, *, B, block_b, size_in, size_h, size_out,
                    has_shortcut, single_buffer_weights):
    x = args[0]
    grid = (B // block_b,)

    weight_mode = (pl.Buffered(buffer_count=1)
                   if single_buffer_weights else None)

    x_spec = pl.BlockSpec((block_b, size_in), lambda i: (i, 0))
    w0_spec = _const_spec((size_in, size_h), weight_mode)
    b0_spec = _const_spec((1, size_h), weight_mode)
    w1_spec = _const_spec((size_h, size_out), weight_mode)
    b1_spec = _const_spec((1, size_out), weight_mode)
    out_spec = pl.BlockSpec((block_b, size_out), lambda i: (i, 0))

    if has_shortcut:
        ws_spec = _const_spec((size_in, size_out), weight_mode)
        kernel = _resnet_block_kernel_shortcut
        in_specs = [x_spec, w0_spec, b0_spec, w1_spec, b1_spec, ws_spec]
    else:
        kernel = _resnet_block_kernel_identity
        in_specs = [x_spec, w0_spec, b0_spec, w1_spec, b1_spec]

    flops = 2 * B * (size_in * size_h + size_h * size_out)
    if has_shortcut:
        flops += 2 * B * size_in * size_out
    bytes_accessed = sum(int(a.size) * a.dtype.itemsize for a in args)
    bytes_accessed += B * size_out * x.dtype.itemsize

    return pl.pallas_call(
        kernel,
        out_shape=jax.ShapeDtypeStruct((B, size_out), x.dtype),
        grid_spec=pltpu.PrefetchScalarGridSpec(
            num_scalar_prefetch=0,
            grid=grid,
            in_specs=in_specs,
            out_specs=out_spec,
        ),
        compiler_params=pltpu.CompilerParams(
            dimension_semantics=("parallel",),
            vmem_limit_bytes=_vmem_limit_bytes(
                block_b, size_in, size_h, size_out, x.dtype.itemsize,
                has_shortcut, single_buffer_weights),
        ),
        cost_estimate=pl.CostEstimate(
            flops=flops, transcendentals=0, bytes_accessed=bytes_accessed),
    )(*args)


def resnet_block_fc(x, params, *, block_b=None):
    """ResnetBlockFC forward pass as a Pallas TPU kernel.

    x: (B, size_in) array.
    params: dict with 'w0' (size_in, size_h), 'b0' (1, size_h),
            'w1' (size_h, size_out), 'b1' (1, size_out),
            and optionally 'ws' (size_in, size_out) when size_in != size_out.

    Note: on v5e especially, prefer bf16 x/params when tolerance allows
    (halves HBM bytes; avoids the slow f32 MXU path). Accumulation is f32.
    """
    B, size_in = x.shape
    w0, b0, w1, b1 = params["w0"], params["b0"], params["w1"], params["b1"]
    size_h = w0.shape[1]
    size_out = w1.shape[1]
    has_shortcut = "ws" in params
    ws = params.get("ws")

    # Lane-dense output: pad the out feature axis (and, for the identity
    # shortcut, the matching in axis) to a multiple of 128 so the output tile
    # is stored with unmasked full-lane vst; slice the padding off afterwards.
    size_out_p = _round_up(max(size_out, 128), 128)
    pad_out = size_out_p - size_out
    size_in_p = size_in
    if pad_out:
        w1 = jnp.pad(w1, ((0, 0), (0, pad_out)))
        b1 = jnp.pad(b1, ((0, 0), (0, pad_out)))
        if has_shortcut:
            ws = jnp.pad(ws, ((0, 0), (0, pad_out)))
        else:
            # identity shortcut: size_in == size_out, keep shapes consistent.
            size_in_p = size_out_p
            x = jnp.pad(x, ((0, 0), (0, pad_out)))
            w0 = jnp.pad(w0, ((0, pad_out), (0, 0)))

    if block_b is None or block_b > B or B % block_b != 0:
        block_b = _choose_block_b(B, x.dtype.itemsize, size_in_p, size_out_p)

    args = (x, w0, b0, w1, b1)
    if has_shortcut:
        args = args + (ws,)

    fwd = functools.partial(
        _pallas_forward, args, B=B, block_b=block_b, size_in=size_in_p,
        size_h=size_h, size_out=size_out_p, has_shortcut=has_shortcut)
    try:
        # Weight/bias blocks never change -> single-buffer them in VMEM.
        out = fwd(single_buffer_weights=True)
    except (TypeError, NotImplementedError, pltpu.LoweringException):
        # Only the pipeline_mode=Buffered(1) rejection falls back; genuine
        # kernel / VMEM errors propagate.
        out = fwd(single_buffer_weights=False)

    if pad_out:
        out = out[:, :size_out]
    return out


# ---------------------------------------------------------------------------
# Parameter init + pure-JAX reference (for testing).
# ---------------------------------------------------------------------------
def init_params(key, size_in, size_out=None, size_h=None, dtype=jnp.float32,
                zero_init_fc1=True):
    """Synthetic init mirroring ResnetBlockFC.__init__ shapes.

    zero_init_fc1=True reproduces `nn.init.zeros_(self.fc_1.weight)`;
    set it False to exercise the full fc_1 path numerically.
    """
    if size_out is None:
        size_out = size_in
    if size_h is None:
        size_h = min(size_in, size_out)
    k0, k1, k2, k3, k4 = jax.random.split(key, 5)
    params = {
        "w0": (jax.random.normal(k0, (size_in, size_h)) * 0.1).astype(dtype),
        "b0": (jax.random.normal(k1, (1, size_h)) * 0.1).astype(dtype),
        "w1": (jnp.zeros((size_h, size_out), dtype) if zero_init_fc1 else
               (jax.random.normal(k4, (size_h, size_out)) * 0.1).astype(dtype)),
        "b1": (jax.random.normal(k2, (1, size_out)) * 0.1).astype(dtype),
    }
    if size_in != size_out:
        params["ws"] = (jax.random.normal(k3, (size_in, size_out)) * 0.1
                        ).astype(dtype)
    return params


def resnet_block_fc_ref(x, params):
    """Pure-JAX float32 reference of the forward pass."""
    xf = x.astype(jnp.float32)
    w0 = params["w0"].astype(jnp.float32)
    b0 = params["b0"].astype(jnp.float32)
    w1 = params["w1"].astype(jnp.float32)
    b1 = params["b1"].astype(jnp.float32)
    net = jnp.maximum(xf, 0.0) @ w0 + b0
    dx = jnp.maximum(net, 0.0) @ w1 + b1
    if "ws" in params:
        x_s = xf @ params["ws"].astype(jnp.float32)
    else:
        x_s = xf
    return x_s + dx


if __name__ == "__main__":
    key = jax.random.PRNGKey(0)
    k_x, k_xb, k_p1, k_p2, k_p3, k_p4 = jax.random.split(key, 6)

    # Case 1: size_in != size_out, non-128 size_out (exercises lane padding),
    #         torch-faithful zero-initialized fc_1 weight.
    B, size_in, size_out = 256, 32, 64
    x = jax.random.normal(k_x, (B, size_in), jnp.float32)
    params1 = init_params(k_p1, size_in, size_out)
    out1 = jax.block_until_ready(resnet_block_fc(x, params1))
    ref1 = resnet_block_fc_ref(x, params1)
    assert out1.shape == (B, size_out)
    assert jnp.allclose(out1, ref1, atol=1e-3, rtol=1e-3)

    # Case 2: same shapes with a non-zero ("trained") W1 to exercise fc_1.
    params2 = init_params(k_p2, size_in, size_out, zero_init_fc1=False)
    out2 = jax.block_until_ready(resnet_block_fc(x, params2))
    ref2 = resnet_block_fc_ref(x, params2)
    assert jnp.allclose(out2, ref2, atol=1e-3, rtol=1e-3)

    # Case 3: size_in == size_out (identity shortcut), non-128 feature dim.
    params3 = init_params(k_p3, size_in, zero_init_fc1=False)
    out3 = jax.block_until_ready(resnet_block_fc(x, params3))
    ref3 = resnet_block_fc_ref(x, params3)
    assert out3.shape == (B, size_in)
    assert jnp.allclose(out3, ref3, atol=1e-3, rtol=1e-3)

    # Case 4: bf16 activations + params, 128-aligned dims (MXU fast path).
    xb = jax.random.normal(k_xb, (B, 128), jnp.float32).astype(jnp.bfloat16)
    params4 = init_params(k_p4, 128, 256, dtype=jnp.bfloat16,
                          zero_init_fc1=False)
    out4 = jax.block_until_ready(resnet_block_fc(xb, params4))
    ref4 = resnet_block_fc_ref(xb, params4)
    assert out4.dtype == jnp.bfloat16
    assert jnp.allclose(out4.astype(jnp.float32), ref4, atol=1.5e-1,
                        rtol=1.5e-1)

    print("KERNEL_OK")
</pallas_src>

<mosaic_0001>
module attributes {stable_mosaic.version = 11 : i64} {
  func.func @_resnet_block_kernel_shortcut(%arg0: i32, %arg1: memref<64x32xf32, #tpu.memory_space<vmem>>, %arg2: memref<32x32xf32, #tpu.memory_space<vmem>>, %arg3: memref<1x32xf32, #tpu.memory_space<vmem>>, %arg4: memref<32x128xf32, #tpu.memory_space<vmem>>, %arg5: memref<1x128xf32, #tpu.memory_space<vmem>>, %arg6: memref<32x128xf32, #tpu.memory_space<vmem>>, %arg7: memref<64x128xf32, #tpu.memory_space<vmem>>) attributes {dimension_semantics = [#tpu.dimension_semantics<parallel>], iteration_bounds = array<i64: 4>, scalar_prefetch = 0 : i64, scratch_operands = 0 : i64, tpu.core_type = #tpu.core_type<tc>, window_params = [{transform_indices = @transform_0, window_bounds = array<i64: 64, 32>}, {pipeline_mode = #tpu.pipeline_mode<synchronous>, transform_indices = @transform_1, window_bounds = array<i64: 32, 32>}, {pipeline_mode = #tpu.pipeline_mode<synchronous>, transform_indices = @transform_2, window_bounds = array<i64: 1, 32>}, {pipeline_mode = #tpu.pipeline_mode<synchronous>, transform_indices = @transform_3, window_bounds = array<i64: 32, 128>}, {pipeline_mode = #tpu.pipeline_mode<synchronous>, transform_indices = @transform_4, window_bounds = array<i64: 1, 128>}, {pipeline_mode = #tpu.pipeline_mode<synchronous>, transform_indices = @transform_5, window_bounds = array<i64: 32, 128>}, {transform_indices = @transform_6, window_bounds = array<i64: 64, 128>}]} {
    %c0 = arith.constant 0 : index
    %c0_0 = arith.constant 0 : index
    %0 = vector.load %arg1[%c0, %c0_0] : memref<64x32xf32, #tpu.memory_space<vmem>>, vector<64x32xf32>
    %c0_1 = arith.constant 0 : index
    %c0_2 = arith.constant 0 : index
    %1 = vector.load %arg6[%c0_1, %c0_2] : memref<32x128xf32, #tpu.memory_space<vmem>>, vector<32x128xf32>
    %cst = arith.constant dense<0.000000e+00> : vector<64x128xf32>
    %2 = tpu.matmul %0, %1, %cst {dimension_numbers = #tpu.dot_dimension_numbers<[1], [0], [0], [1], [0, 0, 1, 1], [], []>} : vector<64x32xf32>, vector<32x128xf32>, vector<64x128xf32> -> vector<64x128xf32>
    %cst_3 = arith.constant 0.000000e+00 : f32
    %3 = vector.broadcast %cst_3 : f32 to vector<64x32xf32>
    %4 = arith.maximumf %0, %3 : vector<64x32xf32>
    %c0_4 = arith.constant 0 : index
    %c0_5 = arith.constant 0 : index
    %5 = vector.load %arg2[%c0_4, %c0_5] : memref<32x32xf32, #tpu.memory_space<vmem>>, vector<32x32xf32>
    %cst_6 = arith.constant dense<0.000000e+00> : vector<64x32xf32>
    %6 = tpu.matmul %4, %5, %cst_6 {dimension_numbers = #tpu.dot_dimension_numbers<[1], [0], [0], [1], [0, 0, 1, 1], [], []>} : vector<64x32xf32>, vector<32x32xf32>, vector<64x32xf32> -> vector<64x32xf32>
    %c0_7 = arith.constant 0 : index
    %c0_8 = arith.constant 0 : index
    %7 = vector.load %arg3[%c0_7, %c0_8] : memref<1x32xf32, #tpu.memory_space<vmem>>, vector<1x32xf32>
    %8 = vector.broadcast %7 : vector<1x32xf32> to vector<64x32xf32>
    %9 = arith.addf %6, %8 : vector<64x32xf32>
    %cst_9 = arith.constant 0.000000e+00 : f32
    %10 = vector.broadcast %cst_9 : f32 to vector<64x32xf32>
    %11 = arith.maximumf %9, %10 : vector<64x32xf32>
    %c0_10 = arith.constant 0 : index
    %c0_11 = arith.constant 0 : index
    %12 = vector.load %arg4[%c0_10, %c0_11] : memref<32x128xf32, #tpu.memory_space<vmem>>, vector<32x128xf32>
    %cst_12 = arith.constant dense<0.000000e+00> : vector<64x128xf32>
    %13 = tpu.matmul %11, %12, %cst_12 {dimension_numbers = #tpu.dot_dimension_numbers<[1], [0], [0], [1], [0, 0, 1, 1], [], []>} : vector<64x32xf32>, vector<32x128xf32>, vector<64x128xf32> -> vector<64x128xf32>
    %14 = arith.addf %2, %13 : vector<64x128xf32>
    %c0_13 = arith.constant 0 : index
    %c0_14 = arith.constant 0 : index
    %15 = vector.load %arg5[%c0_13, %c0_14] : memref<1x128xf32, #tpu.memory_space<vmem>>, vector<1x128xf32>
    %16 = vector.broadcast %15 : vector<1x128xf32> to vector<64x128xf32>
    %17 = arith.addf %14, %16 : vector<64x128xf32>
    %c0_15 = arith.constant 0 : index
    %c0_16 = arith.constant 0 : index
    %18 = vector.load %arg7[%c0_15, %c0_16] : memref<64x128xf32, #tpu.memory_space<vmem>>, vector<64x128xf32>
    tpu.vector_store %arg7[%c0_15, %c0_16], %17 {strides = array<i32>} : memref<64x128xf32, #tpu.memory_space<vmem>>, vector<64x128xf32>,
    return
  }
  func.func @transform_0(%arg0: i32) -> (i32, i32) {
    %c0_i32 = arith.constant 0 : i32
    %c0_i32_0 = arith.constant 0 : i32
    return %arg0, %c0_i32 : i32, i32
  }
  func.func @transform_1(%arg0: i32) -> (i32, i32) {
    %c0_i32 = arith.constant 0 : i32
    %c0_i32_0 = arith.constant 0 : i32
    %c0_i32_1 = arith.constant 0 : i32
    return %c0_i32, %c0_i32_0 : i32, i32
  }
  func.func @transform_2(%arg0: i32) -> (i32, i32) {
    %c0_i32 = arith.constant 0 : i32
    %c0_i32_0 = arith.constant 0 : i32
    %c0_i32_1 = arith.constant 0 : i32
    return %c0_i32, %c0_i32_0 : i32, i32
  }
  func.func @transform_3(%arg0: i32) -> (i32, i32) {
    %c0_i32 = arith.constant 0 : i32
    %c0_i32_0 = arith.constant 0 : i32
    %c0_i32_1 = arith.constant 0 : i32
    return %c0_i32, %c0_i32_0 : i32, i32
  }
  func.func @transform_4(%arg0: i32) -> (i32, i32) {
    %c0_i32 = arith.constant 0 : i32
    %c0_i32_0 = arith.constant 0 : i32
    %c0_i32_1 = arith.constant 0 : i32
    return %c0_i32, %c0_i32_0 : i32, i32
  }
  func.func @transform_5(%arg0: i32) -> (i32, i32) {
    %c0_i32 = arith.constant 0 : i32
    %c0_i32_0 = arith.constant 0 : i32
    %c0_i32_1 = arith.constant 0 : i32
    return %c0_i32, %c0_i32_0 : i32, i32
  }
  func.func @transform_6(%arg0: i32) -> (i32, i32) {
    %c0_i32 = arith.constant 0 : i32
    %c0_i32_0 = arith.constant 0 : i32
    return %arg0, %c0_i32 : i32, i32
  }
}

</mosaic_0001>

<llo_original>
// kernel: tpu_custom_call.1
$region0: #{tpu_custom_call.1}
  #allocation0 [shape = 'u32[]', space=smem, size = 0x4, offset = 0x4, fixed_abs, tag = 'smem constant byte address 0x4 - core index']
  #allocation1 [shape = 'u32[144,128]{1,0:T(1,128)}', space=vmem, size = 0x12000, scoped, tag = 'internal scratch']
  %s0 = inlined_call_operand.vmem [shape: f32[256,32], index: 0, kind: input, shape index: {}]
  %s1 = inlined_call_operand.vmem [shape: f32[32,32], index: 1, kind: input, shape index: {}]
  %s2 = inlined_call_operand.vmem [shape: f32[1,32], index: 2, kind: input, shape index: {}]
  %s3 = inlined_call_operand.vmem [shape: f32[32,128], index: 3, kind: input, shape index: {}]
  %s4 = inlined_call_operand.vmem [shape: f32[1,128], index: 4, kind: input, shape index: {}]
  %s5 = inlined_call_operand.vmem [shape: f32[32,128], index: 5, kind: input, shape index: {}]
  %s6 = inlined_call_operand.hbm [shape: f32[256,128], index: 6, kind: output, shape index: {}]
  %s7 = sld [smem:[#allocation0]]
  $region57: #{tpu_custom_call.1} parent=0
    _
  %s9 = ssub.s32 1, %s7
  %s10 = scalar_select 0, %s9, %s7
  $region1: #{tpu_custom_call.1} parent=0
    #allocation2 [shape = 'u8[65536]{0}', space=vmem, size = 0x10000, scoped, tag = 'output window, operand 0']
    #allocation3 [shape = 's32[2]{0}', space=sflag, size = 0x8, scoped, tag = 'scoped memory for tpu_custom_call.1']
    %11 = vsyncpa [#allocation3], 0
    %s12 = scalar_lea.sflag [#allocation3], 1
    %13 = vsyncpa %s12, 0
    loop: start=0, step=1, limit=6
    $region2: #{tpu_custom_call.1} parent=1 // loop_pre_header
      _
    $region3: #{tpu_custom_call.1} parent=1 // loop_header
      %s15 = sphi 0, %s19
      %p16 = scmp.ge.s32.totalorder %s15, 6
      %s25 = sphi 0, %s27
      %s28 = sphi 0, %s25
      %s29 = sphi 0, %s28
      %s45 = sphi 0, %s29
      %s49 = sphi 0, %s49
      %s51 = sphi 0, %s49
      %s52 = sphi 0, %s51
      %s66 = sphi 0, %s52
      %s70 = sphi 0, %s70
      %s72 = sphi 0, %s70
      %s73 = sphi 0, %s72
      %s87 = sphi 0, %s73
      %s91 = sphi 0, %s91
      %s93 = sphi 0, %s91
      %s94 = sphi 0, %s93
      %s108 = sphi 0, %s94
      %s112 = sphi 0, %s112
      %s114 = sphi 0, %s112
      %s115 = sphi 0, %s114
      %s129 = sphi 0, %s115
      %s133 = sphi 0, %s133
      %s135 = sphi 0, %s133
      %s136 = sphi 0, %s135
      %s150 = sphi 0, %s136
      %s156 = sphi 0, %s158
      %s159 = sphi 0, %s156
      %s160 = sphi 0, %s159
      %s176 = sphi 0, %s160
    $region4: #{tpu_custom_call.1} parent=1 // loop_header_branch
      %18 = sbr.rel (%p16) target = $region8
    $region5: #{tpu_custom_call.1} parent=1 // loop_body
      %s20 = ssub.s32 %s15, 1
      %s21 = ssub.s32 %s15, 2
      %s22 = sadd.s32 %s15, 1
      %s23 = ssub.s32 %s15, %s22
      %p24 = scmp.eq.s32.totalorder %s23, 0
      %s26 = sadd.s32 %s25, 1
      %s27 = scalar_select %p24, %s25, %s26
      %p30 = pneg %p24
      %p31 = scmp.eq.s32.totalorder %s15, 3
      %p32 = por %p30, %p31
      %p33 = scmp.ne.s32.totalorder %s25, %s28
      %p34 = scmp.eq.s32.totalorder %s15, 0
      %p35 = por %p33, %p34
      %p36 = scmp.ne.s32.totalorder %s25, %s28
      %p37 = scmp.eq.s32.totalorder %s20, 3
      %p38 = por %p36, %p37
      %p39 = scmp.ne.s32.totalorder %s28, %s29
      %p40 = scmp.eq.s32.totalorder %s20, 0
      %p41 = por %p39, %p40
      %p42 = scmp.ne.s32.totalorder %s28, %s29
      %p43 = scmp.eq.s32.totalorder %s21, 3
      %p44 = por %p42, %p43
      %p46 = scmp.ne.s32.totalorder %s29, %s45
      %p47 = scmp.eq.s32.totalorder %s21, 0
      %p48 = por %p46, %p47
      %s50 = sadd.s32 %s49, 1
      %p53 = scmp.eq.s32.totalorder %s15, 3
      %p54 = scmp.ne.s32.totalorder %s49, %s51
      %p55 = scmp.eq.s32.totalorder %s15, 0
      %p56 = por %p54, %p55
      %p57 = scmp.ne.s32.totalorder %s49, %s51
      %p58 = scmp.eq.s32.totalorder %s20, 3
      %p59 = por %p57, %p58
      %p60 = scmp.ne.s32.totalorder %s51, %s52
      %p61 = scmp.eq.s32.totalorder %s20, 0
      %p62 = por %p60, %p61
      %p63 = scmp.ne.s32.totalorder %s51, %s52
      %p64 = scmp.eq.s32.totalorder %s21, 3
      %p65 = por %p63, %p64
      %p67 = scmp.ne.s32.totalorder %s52, %s66
      %p68 = scmp.eq.s32.totalorder %s21, 0
      %p69 = por %p67, %p68
      %s71 = sadd.s32 %s70, 1
      %p74 = scmp.eq.s32.totalorder %s15, 3
      %p75 = scmp.ne.s32.totalorder %s70, %s72
      %p76 = scmp.eq.s32.totalorder %s15, 0
      %p77 = por %p75, %p76
      %p78 = scmp.ne.s32.totalorder %s70, %s72
      %p79 = scmp.eq.s32.totalorder %s20, 3
      %p80 = por %p78, %p79
      %p81 = scmp.ne.s32.totalorder %s72, %s73
      %p82 = scmp.eq.s32.totalorder %s20, 0
      %p83 = por %p81, %p82
      %p84 = scmp.ne.s32.totalorder %s72, %s73
      %p85 = scmp.eq.s32.totalorder %s21, 3
      %p86 = por %p84, %p85
      %p88 = scmp.ne.s32.totalorder %s73, %s87
      %p89 = scmp.eq.s32.totalorder %s21, 0
      %p90 = por %p88, %p89
      %s92 = sadd.s32 %s91, 1
      %p95 = scmp.eq.s32.totalorder %s15, 3
      %p96 = scmp.ne.s32.totalorder %s91, %s93
      %p97 = scmp.eq.s32.totalorder %s15, 0
      %p98 = por %p96, %p97
      %p99 = scmp.ne.s32.totalorder %s91, %s93
      %p100 = scmp.eq.s32.totalorder %s20, 3
      %p101 = por %p99, %p100
      %p102 = scmp.ne.s32.totalorder %s93, %s94
      %p103 = scmp.eq.s32.totalorder %s20, 0
      %p104 = por %p102, %p103
      %p105 = scmp.ne.s32.totalorder %s93, %s94
      %p106 = scmp.eq.s32.totalorder %s21, 3
      %p107 = por %p105, %p106
      %p109 = scmp.ne.s32.totalorder %s94, %s108
      %p110 = scmp.eq.s32.totalorder %s21, 0
      %p111 = por %p109, %p110
      %s113 = sadd.s32 %s112, 1
      %p116 = scmp.eq.s32.totalorder %s15, 3
      %p117 = scmp.ne.s32.totalorder %s112, %s114
      %p118 = scmp.eq.s32.totalorder %s15, 0
      %p119 = por %p117, %p118
      %p120 = scmp.ne.s32.totalorder %s112, %s114
      %p121 = scmp.eq.s32.totalorder %s20, 3
      %p122 = por %p120, %p121
      %p123 = scmp.ne.s32.totalorder %s114, %s115
      %p124 = scmp.eq.s32.totalorder %s20, 0
      %p125 = por %p123, %p124
      %p126 = scmp.ne.s32.totalorder %s114, %s115
      %p127 = scmp.eq.s32.totalorder %s21, 3
      %p128 = por %p126, %p127
      %p130 = scmp.ne.s32.totalorder %s115, %s129
      %p131 = scmp.eq.s32.totalorder %s21, 0
      %p132 = por %p130, %p131
      %s134 = sadd.s32 %s133, 1
      %p137 = scmp.eq.s32.totalorder %s15, 3
      %p138 = scmp.ne.s32.totalorder %s133, %s135
      %p139 = scmp.eq.s32.totalorder %s15, 0
      %p140 = por %p138, %p139
      %p141 = scmp.ne.s32.totalorder %s133, %s135
      %p142 = scmp.eq.s32.totalorder %s20, 3
      %p143 = por %p141, %p142
      %p144 = scmp.ne.s32.totalorder %s135, %s136
      %p145 = scmp.eq.s32.totalorder %s20, 0
      %p146 = por %p144, %p145
      %p147 = scmp.ne.s32.totalorder %s135, %s136
      %p148 = scmp.eq.s32.totalorder %s21, 3
      %p149 = por %p147, %p148
      %p151 = scmp.ne.s32.totalorder %s136, %s150
      %p152 = scmp.eq.s32.totalorder %s21, 0
      %p153 = por %p151, %p152
      %s154 = ssub.s32 %s15, %s22
      %p155 = scmp.eq.s32.totalorder %s154, 0
      %s157 = sadd.s32 %s156, 1
      %s158 = scalar_select %p155, %s156, %s157
      %p161 = pneg %p155
      %p162 = scmp.eq.s32.totalorder %s15, 3
      %p163 = por %p161, %p162
      %p164 = scmp.ne.s32.totalorder %s156, %s159
      %p165 = scmp.eq.s32.totalorder %s15, 0
      %p166 = por %p164, %p165
      %p167 = scmp.ne.s32.totalorder %s156, %s159
      %p168 = scmp.eq.s32.totalorder %s20, 3
      %p169 = por %p167, %p168
      %p170 = scmp.ne.s32.totalorder %s159, %s160
      %p171 = scmp.eq.s32.totalorder %s20, 0
      %p172 = por %p170, %p171
      %p173 = scmp.ne.s32.totalorder %s159, %s160
      %p174 = scmp.eq.s32.totalorder %s21, 3
      %p175 = por %p173, %p174
      %p177 = scmp.ne.s32.totalorder %s160, %s176
      %p178 = scmp.eq.s32.totalorder %s21, 0
      %p179 = por %p177, %p178
      %p180 = scmp.le.s32.totalorder 1, %s15
      %p181 = scmp.lt.s32.totalorder %s15, 5
      %p182 = pnand %p180, %p181
      %p183 = pneg %p182
      // Predicated region
      $region9: #{tpu_custom_call.1} parent=5 // pred_check
        _
      $region10: #{tpu_custom_call.1} parent=5 // pred_check_branch
        %185 = sbr.rel (%p182) target = $region12
      $region11: #{tpu_custom_call.1} parent=5 // pred_region
        %s186 = ssub.s32 %s15, 1
        // Predicated region
        $region13: #{tpu_custom_call.1} parent=11 // pred_check
          %p187 = pneg %p62
        $region14: #{tpu_custom_call.1} parent=11 // pred_check_branch
          %189 = sbr.rel (%p187) target = $region16
        $region15: #{tpu_custom_call.1} parent=11 // pred_region
          _
        $region16: #{tpu_custom_call.1} parent=11 // pred_fallthru
          _
        // Predicated region
        $region17: #{tpu_custom_call.1} parent=11 // pred_check
          %p190 = pneg %p83
        $region18: #{tpu_custom_call.1} parent=11 // pred_check_branch
          %192 = sbr.rel (%p190) target = $region20
        $region19: #{tpu_custom_call.1} parent=11 // pred_region
          _
        $region20: #{tpu_custom_call.1} parent=11 // pred_fallthru
          _
        // Predicated region
        $region21: #{tpu_custom_call.1} parent=11 // pred_check
          %p193 = pneg %p104
        $region22: #{tpu_custom_call.1} parent=11 // pred_check_branch
          %195 = sbr.rel (%p193) target = $region24
        $region23: #{tpu_custom_call.1} parent=11 // pred_region
          _
        $region24: #{tpu_custom_call.1} parent=11 // pred_fallthru
          _
        // Predicated region
        $region25: #{tpu_custom_call.1} parent=11 // pred_check
          %p196 = pneg %p125
        $region26: #{tpu_custom_call.1} parent=11 // pred_check_branch
          %198 = sbr.rel (%p196) target = $region28
        $region27: #{tpu_custom_call.1} parent=11 // pred_region
          _
        $region28: #{tpu_custom_call.1} parent=11 // pred_fallthru
          _
        // Predicated region
        $region29: #{tpu_custom_call.1} parent=11 // pred_check
          %p199 = pneg %p146
        $region30: #{tpu_custom_call.1} parent=11 // pred_check_branch
          %201 = sbr.rel (%p199) target = $region32
        $region31: #{tpu_custom_call.1} parent=11 // pred_region
          _
        $region32: #{tpu_custom_call.1} parent=11 // pred_fallthru
          _
      $region12: #{tpu_custom_call.1} parent=5 // pred_fallthru
        _
      %p202 = scmp.lt.s32.totalorder %s15, 4
      // Predicated region
      $region33: #{tpu_custom_call.1} parent=5 // pred_check
        %p203 = pneg %p202
      $region34: #{tpu_custom_call.1} parent=5 // pred_check_branch
        %205 = sbr.rel (%p203) target = $region36
      $region35: #{tpu_custom_call.1} parent=5 // pred_region
        // Predicated region
        $region37: #{tpu_custom_call.1} parent=35 // pred_check
          %p206 = pneg %p35
        $region38: #{tpu_custom_call.1} parent=35 // pred_check_branch
          %208 = sbr.rel (%p206) target = $region40
        $region39: #{tpu_custom_call.1} parent=35 // pred_region
          %s209 = smul.u32 8, %s15
          %p210 = scmp.lt.s32.totalorder %s209, 31
          %s211 = scalar_select %p210, %s209, 31
          %s212 = smul.addr %s211, 8
          %s213 = scalar_lea.vmem %s0, %s212
          %s214 = smul.u32 8, %s15
        $region40: #{tpu_custom_call.1} parent=35 // pred_fallthru
          _
      $region36: #{tpu_custom_call.1} parent=5 // pred_fallthru
        _
      %p215 = scmp.le.s32.totalorder 1, %s15
      %p216 = scmp.lt.s32.totalorder %s15, 5
      %p217 = pnand %p215, %p216
      %p218 = pneg %p217
      // Predicated region
      $region41: #{tpu_custom_call.1} parent=5 // pred_check
        _
      $region42: #{tpu_custom_call.1} parent=5 // pred_check_branch
        %220 = sbr.rel (%p217) target = $region44
      $region43: #{tpu_custom_call.1} parent=5 // pred_region
        %s221 = ssub.s32 %s15, 1
        %s222 = smul.u32 8, %s20
        %p223 = scmp.lt.s32.totalorder %s222, 31
        %s224 = scalar_select %p223, %s222, 31
        %s225 = smul.addr %s224, 8
        %s226 = scalar_lea.vmem %s0, %s225
        %p227 = pneg %p41
        %p228 = pneg %p38
        %p229 = pneg %p62
        %p230 = pneg %p59
        %p231 = pneg %p83
        %p232 = pneg %p80
        %p233 = pneg %p104
        %p234 = pneg %p101
        %p235 = pneg %p125
        %p236 = pneg %p122
        %p237 = pneg %p146
        %p238 = pneg %p143
        %p239 = pneg %p172
        %p240 = pneg %p169
        %s241 = sand.u32 %s159, 1
        %s242 = scalar_lea.sflag [#allocation3], %s241
        %s243 = sand.u32 %s159, 1
        %s244 = smul.addr %s243, 64
        %s245 = scalar_lea.vmem [#allocation2], %s244
        %s246 = smul.u32 8, %s20
        %p247 = scmp.lt.s32.totalorder %s246, 31
        %s248 = scalar_select %p247, %s246, 31
        %s249 = smul.addr %s248, 8
        %s250 = scalar_lea.vmem %s0, %s249
        %s251 = smul.u32 8, %s20
        %s252 = smul.u32 8, %s20
        %v253 = vld [vmem:[%s250] sm:$0xff]
        %v254 = vld [vmem:[%s250 + $0x8] sm:$0xff]
        %v255 = vld [vmem:[%s250 + $0x10] sm:$0xff]
        %v256 = vld [vmem:[%s250 + $0x18] sm:$0xff]
        %v257 = vld [vmem:[%s250 + $0x20] sm:$0xff]
        %v258 = vld [vmem:[%s250 + $0x28] sm:$0xff]
        %v259 = vld [vmem:[%s250 + $0x30] sm:$0xff]
        %v260 = vld [vmem:[%s250 + $0x38] sm:$0xff]
        %v261 = vld [vmem:[%s5] sm:$0xff]
        %v262 = vld [vmem:[%s5 + $0x8] sm:$0xff]
        %v263 = vld [vmem:[%s5 + $0x10] sm:$0xff]
        %v264 = vld [vmem:[%s5 + $0x18] sm:$0xff]
        %v265 = vmax.f32 %v253, 0.0
        %v266 = vmax.f32 %v254, 0.0
        %v267 = vmax.f32 %v255, 0.0
        %v268 = vmax.f32 %v256, 0.0
        %v269 = vmax.f32 %v257, 0.0
        %v270 = vmax.f32 %v258, 0.0
        %v271 = vmax.f32 %v259, 0.0
        %v272 = vmax.f32 %v260, 0.0
        %v273 = vld [vmem:[%s1] sm:$0xff]
        %v274 = vld [vmem:[%s1 + $0x8] sm:$0xff]
        %v275 = vld [vmem:[%s1 + $0x10] sm:$0xff]
        %v276 = vld [vmem:[%s1 + $0x18] sm:$0xff]
        %v277 = vld [vmem:[%s2] sm:$0x1]
        %v279 = vlaneseq
        %v280 = vshrl.u32 %v279, 7
        %v281 = vsub.s32 0, %v280
        %v282 = vrot.slane %v277, %v281
        %vm284 = vcmask 261120
        %v286 = vsel %vm284, %v265, 0
        %v289 = vsel %vm284, %v266, 0
        %v292 = vsel %vm284, %v267, 0
        %v295 = vsel %vm284, %v268, 0
        %v298 = vsel %vm284, %v269, 0
        %v301 = vsel %vm284, %v270, 0
        %v304 = vsel %vm284, %v271, 0
        %v307 = vsel %vm284, %v272, 0
        %309 = vmatprep.subr.mxu0 0.0
        %310 = vmatpush1.msra.mxu0 %v273
        %311 = vmatprep.subr.mxu0 0.0
        %312 = vmatpush1.msra.mxu0 %v274
        %313 = vmatprep.subr.mxu0 0.0
        %314 = vmatpush1.msra.mxu0 %v275
        %315 = vmatprep.subr.mxu0 0.0
        %316 = vmatpush1.msra.mxu0 %v276
        %317 = vmatprep.subr.mxu0 0.0
        %318 = vmatpush1.msra.mxu0 0.0
        %319 = vmatprep.subr.mxu0 0.0
        %320 = vmatpush1.msra.mxu0 0.0
        %321 = vmatprep.subr.mxu0 0.0
        %322 = vmatpush1.msra.mxu0 0.0
        %323 = vmatprep.subr.mxu0 0.0
        %324 = vmatpush1.msra.mxu0 0.0
        %325 = vmatprep.subr.mxu0 0.0
        %326 = vmatpush1.msra.mxu0 0.0
        %327 = vmatprep.subr.mxu0 0.0
        %328 = vmatpush1.msra.mxu0 0.0
        %329 = vmatprep.subr.mxu0 0.0
        %330 = vmatpush1.msra.mxu0 0.0
        %331 = vmatprep.subr.mxu0 0.0
        %332 = vmatpush1.msra.mxu0 0.0
        %333 = vmatprep.subr.mxu0 0.0
        %334 = vmatpush1.msra.mxu0 0.0
        %335 = vmatprep.subr.mxu0 0.0
        %336 = vmatpush1.msra.mxu0 0.0
        %337 = vmatprep.subr.mxu0 0.0
        %338 = vmatpush1.msra.mxu0 0.0
        %339 = vmatprep.subr.mxu0 0.0
        %340 = vmatpush1.msra.mxu0 0.0
        %341 = vmatprep.subr.mxu0 0.0
        %342 = vmatpush1.msra.mxu0 0.0
        %343 = vmatprep.subr.mxu0 0.0
        %344 = vmatpush1.msra.mxu0 0.0
        %345 = vmatprep.subr.mxu0 0.0
        %346 = vmatpush1.msra.mxu0 0.0
        %347 = vmatprep.subr.mxu0 0.0
        %348 = vmatpush1.msra.mxu0 0.0
        %349 = vmatprep.subr.mxu0 0.0
        %350 = vmatpush1.msra.mxu0 0.0
        %351 = vmatprep.subr.mxu0 0.0
        %352 = vmatpush1.msra.mxu0 0.0
        %353 = vmatprep.subr.mxu0 0.0
        %354 = vmatpush1.msra.mxu0 0.0
        %355 = vmatprep.subr.mxu0 0.0
        %356 = vmatpush1.msra.mxu0 0.0
        %357 = vmatprep.subr.mxu0 0.0
        %358 = vmatpush1.msra.mxu0 0.0
        %359 = vmatprep.subr.mxu0 0.0
        %360 = vmatpush1.msra.mxu0 0.0
        %361 = vmatprep.subr.mxu0 0.0
        %362 = vmatpush1.msra.mxu0 0.0
        %363 = vmatprep.subr.mxu0 0.0
        %364 = vmatpush1.msra.mxu0 0.0
        %365 = vmatprep.subr.mxu0 0.0
        %366 = vmatpush1.msra.mxu0 0.0
        %367 = vmatprep.subr.mxu0 0.0
        %368 = vmatpush1.msra.mxu0 0.0
        %369 = vmatprep.subr.mxu0 0.0
        %370 = vmatpush1.msra.mxu0 0.0
        %371 = vmatprep.subr.mxu0 0.0
        %372 = vmatpush1.msra.mxu0 0.0
        %373 = vmatprep.mubr.f32.mxu0 0.0
        %374 = vmatmul.mubr.f32.gmra.mrb[0].mxu0 %v286
        %v375 = vpop.f32.mrb[0].mxu0
        %v376 = vadd.f32 %v282, %v375
        %v377 = vpop.f32.mrb[0].mxu0
        %378 = vmatprep.mubr.f32.mxu0 0.0
        %379 = vmatmul.mubr.f32.gmra.mrb[0].mxu0 %v289
        %v380 = vpop.f32.mrb[0].mxu0
        %v381 = vadd.f32 %v282, %v380
        %v382 = vpop.f32.mrb[0].mxu0
        %383 = vmatprep.mubr.f32.mxu0 0.0
        %384 = vmatmul.mubr.f32.gmra.mrb[0].mxu0 %v292
        %v385 = vpop.f32.mrb[0].mxu0
        %v386 = vadd.f32 %v282, %v385
        %v387 = vpop.f32.mrb[0].mxu0
        %388 = vmatprep.mubr.f32.mxu0 0.0
        %389 = vmatmul.mubr.f32.gmra.mrb[0].mxu0 %v295
        %v390 = vpop.f32.mrb[0].mxu0
        %v391 = vadd.f32 %v282, %v390
        %v392 = vpop.f32.mrb[0].mxu0
        %393 = vmatprep.mubr.f32.mxu0 0.0
        %394 = vmatmul.mubr.f32.gmra.mrb[0].mxu0 %v298
        %v395 = vpop.f32.mrb[0].mxu0
        %v396 = vadd.f32 %v282, %v395
        %v397 = vpop.f32.mrb[0].mxu0
        %398 = vmatprep.mubr.f32.mxu0 0.0
        %399 = vmatmul.mubr.f32.gmra.mrb[0].mxu0 %v301
        %v400 = vpop.f32.mrb[0].mxu0
        %v401 = vadd.f32 %v282, %v400
        %v402 = vpop.f32.mrb[0].mxu0
        %403 = vmatprep.mubr.f32.mxu0 0.0
        %404 = vmatmul.mubr.f32.gmra.mrb[0].mxu0 %v304
        %v405 = vpop.f32.mrb[0].mxu0
        %v406 = vadd.f32 %v282, %v405
        %v407 = vpop.f32.mrb[0].mxu0
        %408 = vmatprep.mubr.f32.mxu0 0.0
        %409 = vmatmul.mubr.f32.gmra.mrb[0].mxu0 %v307
        %v410 = vpop.f32.mrb[0].mxu0
        %v411 = vadd.f32 %v282, %v410
        %v412 = vpop.f32.mrb[0].mxu0
        %413 = vdwg.mxu0
        %v414 = vmax.f32 %v376, 0.0
        %v415 = vmax.f32 %v381, 0.0
        %v416 = vmax.f32 %v386, 0.0
        %v417 = vmax.f32 %v391, 0.0
        %v418 = vmax.f32 %v396, 0.0
        %v419 = vmax.f32 %v401, 0.0
        %v420 = vmax.f32 %v406, 0.0
        %v421 = vmax.f32 %v411, 0.0
        %v422 = vld [vmem:[%s3] sm:$0xff]
        %v423 = vld [vmem:[%s3 + $0x8] sm:$0xff]
        %v424 = vld [vmem:[%s3 + $0x10] sm:$0xff]
        %v425 = vld [vmem:[%s3 + $0x18] sm:$0xff]
        %v427 = vsel %vm284, %v414, 0
        %v430 = vsel %vm284, %v415, 0
        %v433 = vsel %vm284, %v416, 0
        %v436 = vsel %vm284, %v417, 0
        %v439 = vsel %vm284, %v418, 0
        %v442 = vsel %vm284, %v419, 0
        %v445 = vsel %vm284, %v420, 0
        %v448 = vsel %vm284, %v421, 0
        %450 = vmatprep.subr.mxu0 0.0
        %451 = vmatpush1.msra.mxu0 %v422
        %452 = vmatprep.subr.mxu0 0.0
        %453 = vmatpush1.msra.mxu0 %v423
        %454 = vmatprep.subr.mxu0 0.0
        %455 = vmatpush1.msra.mxu0 %v424
        %456 = vmatprep.subr.mxu0 0.0
        %457 = vmatpush1.msra.mxu0 %v425
        %458 = vmatprep.subr.mxu0 0.0
        %459 = vmatpush1.msra.mxu0 0.0
        %460 = vmatprep.subr.mxu0 0.0
        %461 = vmatpush1.msra.mxu0 0.0
        %462 = vmatprep.subr.mxu0 0.0
        %463 = vmatpush1.msra.mxu0 0.0
        %464 = vmatprep.subr.mxu0 0.0
        %465 = vmatpush1.msra.mxu0 0.0
        %466 = vmatprep.subr.mxu0 0.0
        %467 = vmatpush1.msra.mxu0 0.0
        %468 = vmatprep.subr.mxu0 0.0
        %469 = vmatpush1.msra.mxu0 0.0
        %470 = vmatprep.subr.mxu0 0.0
        %471 = vmatpush1.msra.mxu0 0.0
        %472 = vmatprep.subr.mxu0 0.0
        %473 = vmatpush1.msra.mxu0 0.0
        %474 = vmatprep.subr.mxu0 0.0
        %475 = vmatpush1.msra.mxu0 0.0
        %476 = vmatprep.subr.mxu0 0.0
        %477 = vmatpush1.msra.mxu0 0.0
        %478 = vmatprep.subr.mxu0 0.0
        %479 = vmatpush1.msra.mxu0 0.0
        %480 = vmatprep.subr.mxu0 0.0
        %481 = vmatpush1.msra.mxu0 0.0
        %482 = vmatprep.subr.mxu0 0.0
        %483 = vmatpush1.msra.mxu0 0.0
        %484 = vmatprep.subr.mxu0 0.0
        %485 = vmatpush1.msra.mxu0 0.0
        %486 = vmatprep.subr.mxu0 0.0
        %487 = vmatpush1.msra.mxu0 0.0
        %488 = vmatprep.subr.mxu0 0.0
        %489 = vmatpush1.msra.mxu0 0.0
        %490 = vmatprep.subr.mxu0 0.0
        %491 = vmatpush1.msra.mxu0 0.0
        %492 = vmatprep.subr.mxu0 0.0
        %493 = vmatpush1.msra.mxu0 0.0
        %494 = vmatprep.subr.mxu0 0.0
        %495 = vmatpush1.msra.mxu0 0.0
        %496 = vmatprep.subr.mxu0 0.0
        %497 = vmatpush1.msra.mxu0 0.0
        %498 = vmatprep.subr.mxu0 0.0
        %499 = vmatpush1.msra.mxu0 0.0
        %500 = vmatprep.subr.mxu0 0.0
        %501 = vmatpush1.msra.mxu0 0.0
        %502 = vmatprep.subr.mxu0 0.0
        %503 = vmatpush1.msra.mxu0 0.0
        %504 = vmatprep.subr.mxu0 0.0
        %505 = vmatpush1.msra.mxu0 0.0
        %506 = vmatprep.subr.mxu0 0.0
        %507 = vmatpush1.msra.mxu0 0.0
        %508 = vmatprep.subr.mxu0 0.0
        %509 = vmatpush1.msra.mxu0 0.0
        %510 = vmatprep.subr.mxu0 0.0
        %511 = vmatpush1.msra.mxu0 0.0
        %512 = vmatprep.subr.mxu0 0.0
        %513 = vmatpush1.msra.mxu0 0.0
        %514 = vmatprep.mubr.f32.mxu0 0.0
        %515 = vmatmul.mubr.f32.gmra.mrb[0].mxu0 %v427
        %v516 = vpop.f32.mrb[0].mxu0
        %v517 = vadd.f32 0.0, %v516
        %v518 = vpop.f32.mrb[0].mxu0
        %519 = vmatprep.mubr.f32.mxu0 0.0
        %520 = vmatmul.mubr.f32.gmra.mrb[0].mxu0 %v430
        %v521 = vpop.f32.mrb[0].mxu0
        %v522 = vadd.f32 0.0, %v521
        %v523 = vpop.f32.mrb[0].mxu0
        %524 = vmatprep.mubr.f32.mxu0 0.0
        %525 = vmatmul.mubr.f32.gmra.mrb[0].mxu0 %v433
        %v526 = vpop.f32.mrb[0].mxu0
        %v527 = vadd.f32 0.0, %v526
        %v528 = vpop.f32.mrb[0].mxu0
        %529 = vmatprep.mubr.f32.mxu0 0.0
        %530 = vmatmul.mubr.f32.gmra.mrb[0].mxu0 %v436
        %v531 = vpop.f32.mrb[0].mxu0
        %v532 = vadd.f32 0.0, %v531
        %v533 = vpop.f32.mrb[0].mxu0
        %534 = vmatprep.mubr.f32.mxu0 0.0
        %535 = vmatmul.mubr.f32.gmra.mrb[0].mxu0 %v439
        %v536 = vpop.f32.mrb[0].mxu0
        %v537 = vadd.f32 0.0, %v536
        %v538 = vpop.f32.mrb[0].mxu0
        %539 = vmatprep.mubr.f32.mxu0 0.0
        %540 = vmatmul.mubr.f32.gmra.mrb[0].mxu0 %v442
        %v541 = vpop.f32.mrb[0].mxu0
        %v542 = vadd.f32 0.0, %v541
        %v543 = vpop.f32.mrb[0].mxu0
        %544 = vmatprep.mubr.f32.mxu0 0.0
        %545 = vmatmul.mubr.f32.gmra.mrb[0].mxu0 %v445
        %v546 = vpop.f32.mrb[0].mxu0
        %v547 = vadd.f32 0.0, %v546
        %v548 = vpop.f32.mrb[0].mxu0
        %549 = vmatprep.mubr.f32.mxu0 0.0
        %550 = vmatmul.mubr.f32.gmra.mrb[0].mxu0 %v448
        %v551 = vpop.f32.mrb[0].mxu0
        %v552 = vadd.f32 0.0, %v551
        %v553 = vpop.f32.mrb[0].mxu0
        %554 = vdwg.mxu0
        %v556 = vsel %vm284, %v253, 0
        %v559 = vsel %vm284, %v254, 0
        %v562 = vsel %vm284, %v255, 0
        %v565 = vsel %vm284, %v256, 0
        %v568 = vsel %vm284, %v257, 0
        %v571 = vsel %vm284, %v258, 0
        %v574 = vsel %vm284, %v259, 0
        %v577 = vsel %vm284, %v260, 0
        %579 = vmatprep.subr.mxu0 0.0
        %580 = vmatpush1.msra.mxu0 %v261
        %581 = vmatprep.subr.mxu0 0.0
        %582 = vmatpush1.msra.mxu0 %v262
        %583 = vmatprep.subr.mxu0 0.0
        %584 = vmatpush1.msra.mxu0 %v263
        %585 = vmatprep.subr.mxu0 0.0
        %586 = vmatpush1.msra.mxu0 %v264
        %587 = vmatprep.subr.mxu0 0.0
        %588 = vmatpush1.msra.mxu0 0.0
        %589 = vmatprep.subr.mxu0 0.0
        %590 = vmatpush1.msra.mxu0 0.0
        %591 = vmatprep.subr.mxu0 0.0
        %592 = vmatpush1.msra.mxu0 0.0
        %593 = vmatprep.subr.mxu0 0.0
        %594 = vmatpush1.msra.mxu0 0.0
        %595 = vmatprep.subr.mxu0 0.0
        %596 = vmatpush1.msra.mxu0 0.0
        %597 = vmatprep.subr.mxu0 0.0
        %598 = vmatpush1.msra.mxu0 0.0
        %599 = vmatprep.subr.mxu0 0.0
        %600 = vmatpush1.msra.mxu0 0.0
        %601 = vmatprep.subr.mxu0 0.0
        %602 = vmatpush1.msra.mxu0 0.0
        %603 = vmatprep.subr.mxu0 0.0
        %604 = vmatpush1.msra.mxu0 0.0
        %605 = vmatprep.subr.mxu0 0.0
        %606 = vmatpush1.msra.mxu0 0.0
        %607 = vmatprep.subr.mxu0 0.0
        %608 = vmatpush1.msra.mxu0 0.0
        %609 = vmatprep.subr.mxu0 0.0
        %610 = vmatpush1.msra.mxu0 0.0
        %611 = vmatprep.subr.mxu0 0.0
        %612 = vmatpush1.msra.mxu0 0.0
        %613 = vmatprep.subr.mxu0 0.0
        %614 = vmatpush1.msra.mxu0 0.0
        %615 = vmatprep.subr.mxu0 0.0
        %616 = vmatpush1.msra.mxu0 0.0
        %617 = vmatprep.subr.mxu0 0.0
        %618 = vmatpush1.msra.mxu0 0.0
        %619 = vmatprep.subr.mxu0 0.0
        %620 = vmatpush1.msra.mxu0 0.0
        %621 = vmatprep.subr.mxu0 0.0
        %622 = vmatpush1.msra.mxu0 0.0
        %623 = vmatprep.subr.mxu0 0.0
        %624 = vmatpush1.msra.mxu0 0.0
        %625 = vmatprep.subr.mxu0 0.0
        %626 = vmatpush1.msra.mxu0 0.0
        %627 = vmatprep.subr.mxu0 0.0
        %628 = vmatpush1.msra.mxu0 0.0
        %629 = vmatprep.subr.mxu0 0.0
        %630 = vmatpush1.msra.mxu0 0.0
        %631 = vmatprep.subr.mxu0 0.0
        %632 = vmatpush1.msra.mxu0 0.0
        %633 = vmatprep.subr.mxu0 0.0
        %634 = vmatpush1.msra.mxu0 0.0
        %635 = vmatprep.subr.mxu0 0.0
        %636 = vmatpush1.msra.mxu0 0.0
        %637 = vmatprep.subr.mxu0 0.0
        %638 = vmatpush1.msra.mxu0 0.0
        %639 = vmatprep.subr.mxu0 0.0
        %640 = vmatpush1.msra.mxu0 0.0
        %641 = vmatprep.subr.mxu0 0.0
        %642 = vmatpush1.msra.mxu0 0.0
        %643 = vmatprep.mubr.f32.mxu0 0.0
        %644 = vmatmul.mubr.f32.gmra.mrb[0].mxu0 %v556
        %v645 = vpop.f32.mrb[0].mxu0
        %v646 = vadd.f32 %v517, %v645
        %v647 = vpop.f32.mrb[0].mxu0
        %648 = vmatprep.mubr.f32.mxu0 0.0
        %649 = vmatmul.mubr.f32.gmra.mrb[0].mxu0 %v559
        %v650 = vpop.f32.mrb[0].mxu0
        %v651 = vadd.f32 %v522, %v650
        %v652 = vpop.f32.mrb[0].mxu0
        %653 = vmatprep.mubr.f32.mxu0 0.0
        %654 = vmatmul.mubr.f32.gmra.mrb[0].mxu0 %v562
        %v655 = vpop.f32.mrb[0].mxu0
        %v656 = vadd.f32 %v527, %v655
        %v657 = vpop.f32.mrb[0].mxu0
        %658 = vmatprep.mubr.f32.mxu0 0.0
        %659 = vmatmul.mubr.f32.gmra.mrb[0].mxu0 %v565
        %v660 = vpop.f32.mrb[0].mxu0
        %v661 = vadd.f32 %v532, %v660
        %v662 = vpop.f32.mrb[0].mxu0
        %663 = vmatprep.mubr.f32.mxu0 0.0
        %664 = vmatmul.mubr.f32.gmra.mrb[0].mxu0 %v568
        %v665 = vpop.f32.mrb[0].mxu0
        %v666 = vadd.f32 %v537, %v665
        %v667 = vpop.f32.mrb[0].mxu0
        %668 = vmatprep.mubr.f32.mxu0 0.0
        %669 = vmatmul.mubr.f32.gmra.mrb[0].mxu0 %v571
        %v670 = vpop.f32.mrb[0].mxu0
        %v671 = vadd.f32 %v542, %v670
        %v672 = vpop.f32.mrb[0].mxu0
        %673 = vmatprep.mubr.f32.mxu0 0.0
        %674 = vmatmul.mubr.f32.gmra.mrb[0].mxu0 %v574
        %v675 = vpop.f32.mrb[0].mxu0
        %v676 = vadd.f32 %v547, %v675
        %v677 = vpop.f32.mrb[0].mxu0
        %678 = vmatprep.mubr.f32.mxu0 0.0
        %679 = vmatmul.mubr.f32.gmra.mrb[0].mxu0 %v577
        %v680 = vpop.f32.mrb[0].mxu0
        %v681 = vadd.f32 %v552, %v680
        %v682 = vpop.f32.mrb[0].mxu0
        %683 = vdwg.mxu0
        %v684 = vld [vmem:[%s4] sm:$0x1]
        %v686 = vlaneseq
        %v687 = vshrl.u32 %v686, 7
        %v688 = vsub.s32 0, %v687
        %v689 = vrot.slane %v684, %v688
        %v691 = vadd.f32 %v646, %v689
        %v692 = vadd.f32 %v651, %v689
        %v693 = vadd.f32 %v656, %v689
        %v694 = vadd.f32 %v661, %v689
        %v695 = vadd.f32 %v666, %v689
        %v696 = vadd.f32 %v671, %v689
        %v697 = vadd.f32 %v676, %v689
        %v698 = vadd.f32 %v681, %v689
        %699 = vst [vmem:[%s245] sm:$0xff] %v691
        %700 = vst [vmem:[%s245 + $0x8] sm:$0xff] %v692
        %701 = vst [vmem:[%s245 + $0x10] sm:$0xff] %v693
        %702 = vst [vmem:[%s245 + $0x18] sm:$0xff] %v694
        %703 = vst [vmem:[%s245 + $0x20] sm:$0xff] %v695
        %704 = vst [vmem:[%s245 + $0x28] sm:$0xff] %v696
        %705 = vst [vmem:[%s245 + $0x30] sm:$0xff] %v697
        %706 = vst [vmem:[%s245 + $0x38] sm:$0xff] %v698
        %s707 = sand.u32 %s159, 1
        %s708 = scalar_lea.sflag [#allocation3], %s707
        %s709 = sand.u32 %s159, 1
        %s710 = smul.addr %s709, 64
        %s711 = scalar_lea.vmem [#allocation2], %s710
        // Predicated region
        $region45: #{tpu_custom_call.1} parent=43 // pred_check
          %p712 = pneg %p169
        $region46: #{tpu_custom_call.1} parent=43 // pred_check_branch
          %714 = sbr.rel (%p712) target = $region48
        $region47: #{tpu_custom_call.1} parent=43 // pred_region
          %s715 = smul.u32 8, %s20
          %s717 = ssub.s32 1024, 1024
          %718 = vsyncadd %s708, %s717
          %s719 = smul.addr %s715, 128
          %s720 = scalar_lea.hbm %s6, %s719
          %s721 = sshll.u32 %s711, 4
          %s722 = int_to_ptr.vmem [resolvable:$true] %s721
          %727 = dma.vmem_to_hbm [thread:$0]  %s722, 1024, %s720, %s708, 128, 128, 8
        $region48: #{tpu_custom_call.1} parent=43 // pred_fallthru
          _
      $region44: #{tpu_custom_call.1} parent=5 // pred_fallthru
        _
      %p728 = scmp.le.s32.totalorder 2, %s15
      // Predicated region
      $region49: #{tpu_custom_call.1} parent=5 // pred_check
        %p729 = pneg %p728
      $region50: #{tpu_custom_call.1} parent=5 // pred_check_branch
        %731 = sbr.rel (%p729) target = $region52
      $region51: #{tpu_custom_call.1} parent=5 // pred_region
        %s732 = ssub.s32 %s15, 2
        // Predicated region
        $region53: #{tpu_custom_call.1} parent=51 // pred_check
          %p733 = pneg %p175
        $region54: #{tpu_custom_call.1} parent=51 // pred_check_branch
          %735 = sbr.rel (%p733) target = $region56
        $region55: #{tpu_custom_call.1} parent=51 // pred_region
          %s736 = sand.u32 %s160, 1
          %s737 = scalar_lea.sflag [#allocation3], %s736
          %s738 = sand.u32 %s160, 1
          %s739 = smul.addr %s738, 64
          %s740 = scalar_lea.vmem [#allocation2], %s739
          %741 = dma.done %s737, 1024
        $region56: #{tpu_custom_call.1} parent=51 // pred_fallthru
          _
      $region52: #{tpu_custom_call.1} parent=5 // pred_fallthru
        _
    $region6: #{tpu_custom_call.1} parent=1 // loop_footer
      %s19 = sadd.s32 1, %s15
    $region7: #{tpu_custom_call.1} parent=1 // loop_footer_branch
      %14 = sbr.rel target = $region3
    $region8: #{tpu_custom_call.1} parent=1 // loop_exit
      _
    %742 = vsyncpa [#allocation3], 1
    %s743 = scalar_lea.sflag [#allocation3], 1
    %744 = vsyncpa %s743, 1

</llo_original>
